<compile_context>
chip_gen: v5e
topology: v5e:2x2
jax: 0.10.0
libtpu: 0.0.40
codegen_flags: <defaults>
</compile_context>

<pallas_src>
from functools import partial

import jax
import jax.numpy as jnp
from jax.experimental import pallas as pl
from jax.experimental.pallas import tpu as pltpu

LANES = 512          # lane width of the persistent flat parameter slab
ROW_QUANTUM = 512    # large slabs: row count padded to a multiple of this
ROW_CAP = 1024       # max rows per lerp tile (2 MiB blocks at 512 lanes f32)


# ----------------------------------------------------------------------------
# Kernel 1: EMA lerp update over the flat (padded) parameter slab.
#   ema_new = ema + (online - ema) * w      (== torch.Tensor.lerp_(online, w))
# Pad rows are zeros in BOTH slabs (same flatten path), so lerping them is a no-op.
# ----------------------------------------------------------------------------
def _ema_lerp_kernel(w_ref, ema_ref, online_ref, out_ref):
    w = w_ref[0, 0]                       # scalar lerp weight from SMEM
    ema = ema_ref[...]
    out_ref[...] = ema + (online_ref[...] - ema) * w


def _padded_rows(n_elems, lanes=LANES):
    """Row count for the slab: deterministic tiling, >=2 grid steps, no divisor hunting."""
    rows = max(-(-n_elems // lanes), 1)
    if rows <= 2 * ROW_QUANTUM:
        return -(-rows // 16) * 16                    # multiple of 16 -> split into 2 tiles
    return -(-rows // ROW_QUANTUM) * ROW_QUANTUM      # multiple of 512 -> 512/1024-row tiles


def _row_tile(rows):
    if rows <= 2 * ROW_QUANTUM:                       # rows is a multiple of 16
        return max(rows // 2, 8)                      # exactly 2 grid steps (v7x: both TCs busy)
    if rows % ROW_CAP == 0:
        return ROW_CAP                                # 2 MiB blocks
    return ROW_QUANTUM                                # 1 MiB blocks


def ema_lerp_update(ema_flat, online_flat, weight):
    """ema_flat / online_flat: (R, L) float32 padded parameter slabs from flatten_params."""
    R, L = ema_flat.shape
    TR = _row_tile(R)
    assert R % TR == 0 and TR % 8 == 0 and L % 128 == 0, (R, TR, L)
    w = jnp.asarray(weight, jnp.float32).reshape(1, 1)
    # 3 streams (ema-in, online-in, out) x 2 pipeline buffers x block bytes, plus slack.
    vmem_bytes = 3 * 2 * TR * L * 4 + (2 << 20)
    return pl.pallas_call(
        _ema_lerp_kernel,
        out_shape=jax.ShapeDtypeStruct((R, L), jnp.float32),
        grid=(R // TR,),
        in_specs=[
            pl.BlockSpec(memory_space=pltpu.MemorySpace.SMEM),   # scalar weight
            pl.BlockSpec((TR, L), lambda i: (i, 0)),
            pl.BlockSpec((TR, L), lambda i: (i, 0)),
        ],
        out_specs=pl.BlockSpec((TR, L), lambda i: (i, 0)),
        input_output_aliases={1: 0},                   # in-place update of the ema slab
        compiler_params=pltpu.CompilerParams(
            dimension_semantics=("parallel",),
            vmem_limit_bytes=max(vmem_bytes, 16 << 20),
        ),
    )(w, ema_flat, online_flat)


@partial(jax.jit, donate_argnums=(0,))
def ema_update_step(ema_flat, online_flat, lerp_weight):
    """In-place EMA lerp over the persistent flat parameter slab (ema buffer donated)."""
    return ema_lerp_update(ema_flat, online_flat, lerp_weight)


# ----------------------------------------------------------------------------
# Kernel 2: ema_model forward = 1x1 conv, computed directly in NCHW layout.
#   out[b, o, t] = sum_c w[o, c] * x[b, c, t] + bias[o]      (t = flattened, 128-padded H*W)
# Single MXU dot per block; spatial axis tiled by a grid (lane-dense stores, bounded VMEM).
# ----------------------------------------------------------------------------
def _conv1x1_kernel(w_ref, b_ref, x_ref, o_ref):
    # w_ref: (Cout, Cin), b_ref: (Cout, 1), x_ref: (Cin, Tt), o_ref: (Cout, Tt)
    o_ref[...] = (
        jnp.dot(w_ref[...], x_ref[...], preferred_element_type=jnp.float32)
        + b_ref[...]
    ).astype(o_ref.dtype)


def _spatial_tile(hw_padded, cap=8192):
    """Spatial (lane) tile: full extent if small, else a multiple of 128 dividing hw_padded."""
    if hw_padded <= cap:
        return hw_padded
    t = cap
    while t >= 128:
        if hw_padded % t == 0:
            return t
        t -= 128
    return 128                                        # hw_padded is a multiple of 128


@partial(jax.jit, static_argnames=("cout",))
def ema_forward_conv1x1(x_nchw, ema_flat, *, cout):
    """x_nchw: (B, Cin, H, W) f32; ema_flat: persistent (R, LANES) slab holding [weight, bias]."""
    B, Cin, H, W = x_nchw.shape
    HW = H * W
    HWp = -(-HW // 128) * 128                         # pad spatial to a multiple of 128
    Tt = _spatial_tile(HWp)

    # Read forward weights straight from static slices of the slab (no unflatten chain).
    flat = ema_flat.reshape(-1)
    w2 = flat[: cout * Cin].reshape(cout, Cin)
    b2 = flat[cout * Cin: cout * Cin + cout].reshape(cout, 1)

    x3 = x_nchw.reshape(B, Cin, HW)                   # contiguous reshape; no transpose
    if HWp != HW:
        x3 = jnp.pad(x3, ((0, 0), (0, 0), (0, HWp - HW)))

    out = pl.pallas_call(
        _conv1x1_kernel,
        out_shape=jax.ShapeDtypeStruct((B, cout, HWp), jnp.float32),
        grid=(B, HWp // Tt),
        in_specs=[
            pl.BlockSpec((cout, Cin), lambda b, t: (0, 0)),
            pl.BlockSpec((cout, 1), lambda b, t: (0, 0)),
            pl.BlockSpec((None, Cin, Tt), lambda b, t: (b, 0, t)),   # batch dim squeezed
        ],
        out_specs=pl.BlockSpec((None, cout, Tt), lambda b, t: (b, 0, t)),
        compiler_params=pltpu.CompilerParams(
            dimension_semantics=("parallel", "parallel")),
    )(w2, b2, x3)

    return out[:, :, :HW].reshape(B, cout, H, W)      # drop spatial pad; already NCHW


# ----------------------------------------------------------------------------
# EMA scheduling glue (host-side scalar math; matches EMA.current_decay / beta semantics).
# The resulting weight is passed to the kernel as a traced f32 array, so no retrace per step.
# ----------------------------------------------------------------------------
def current_decay(step, *, update_after_step=100, inv_gamma=1.0, power=2.0 / 3.0,
                  min_value=0.0, beta=0.9999):
    epoch = max(step - update_after_step - 1, 0)
    if epoch <= 0:
        return 0.0
    value = 1.0 - (1.0 + epoch / inv_gamma) ** (-power)
    return float(min(max(value, min_value), beta))


# ----------------------------------------------------------------------------
# Parameter flatten helper: reformat ONCE at setup into a (rows, 512) f32 slab.
# Both ema and online params are kept persistently in this layout; only tiny static
# slices are read back for the forward pass.
# ----------------------------------------------------------------------------
def flatten_params(params, lanes=LANES):
    flat = jnp.concatenate([jnp.ravel(p) for p in params.values()]).astype(jnp.float32)
    n = flat.shape[0]
    rows = _padded_rows(n, lanes)
    flat = jnp.zeros((rows * lanes,), jnp.float32).at[:n].set(flat)
    return flat.reshape(rows, lanes), n


if __name__ == "__main__":
    key = jax.random.PRNGKey(0)
    k_w, k_b, k_dw, k_db, k_x = jax.random.split(key, 5)

    B, Cin, Cout, H, W = 2, 4, 8, 16, 16

    # Deterministic synthetic "online model" params (PyTorch Conv2d(4, 8, kernel_size=1) shapes).
    online = {
        "conv.weight": jax.random.normal(k_w, (Cout, Cin, 1, 1), jnp.float32) * 0.1,
        "conv.bias":   jax.random.normal(k_b, (Cout,), jnp.float32) * 0.1,
    }
    # EMA shadow starts as a copy (EMA.copy_model_to_ema at step == update_after_step),
    # then the online model drifts by one "training step".
    ema = dict(online)
    online = {
        "conv.weight": online["conv.weight"] + jax.random.normal(k_dw, (Cout, Cin, 1, 1), jnp.float32) * 0.01,
        "conv.bias":   online["conv.bias"] + jax.random.normal(k_db, (Cout,), jnp.float32) * 0.01,
    }

    # Persistent flat layout: flatten ONCE; thereafter the slabs are the canonical state
    # (no per-step re-flatten of the online params).
    ema_flat, _ = flatten_params(ema)
    online_flat, _ = flatten_params(online)

    # --- EMA.update() at steps 150 and 160 (update_every=10): two in-place lerp passes on the
    #     persistent slabs; lerp weight is a traced scalar so no recompilation between steps. ---
    ref_ema = dict(ema)
    for step in (150, 160):
        lerp_w = jnp.float32(1.0 - current_decay(step))
        ema_flat = ema_update_step(ema_flat, online_flat, lerp_w)
        ref_ema = {k: ref_ema[k] + (online[k] - ref_ema[k]) * lerp_w for k in ref_ema}

    # --- EMA.forward(x): run the shadowed ema_model on NCHW input; weights come straight
    #     from static slices of the updated ema slab. ---
    x = jax.random.normal(k_x, (B, Cin, H, W), jnp.float32)
    y = ema_forward_conv1x1(x, ema_flat, cout=Cout)
    y = jax.block_until_ready(y)

    # Reference checks (plain JAX, f32-exact).
    ref_y = (jnp.einsum("bchw,oc->bohw", x, ref_ema["conv.weight"][:, :, 0, 0],
                        precision=jax.lax.Precision.HIGHEST)
             + ref_ema["conv.bias"][None, :, None, None])
    assert y.shape == (B, Cout, H, W)
    assert jnp.allclose(y, ref_y, atol=1e-5, rtol=1e-5)

    flat = ema_flat.reshape(-1)
    w_new = flat[:Cout * Cin].reshape(Cout, Cin, 1, 1)
    b_new = flat[Cout * Cin:Cout * Cin + Cout]
    assert jnp.allclose(w_new, ref_ema["conv.weight"], atol=1e-6, rtol=1e-6)
    assert jnp.allclose(b_new, ref_ema["conv.bias"], atol=1e-6, rtol=1e-6)

    # TODO(synk): PyTorch-side bookkeeping (deepcopy, named_parameters/buffers iteration, step/
    # init_done buffers, device moves, ignore_names/no_ema_names filtering) has no kernel
    # equivalent; it stays host-side glue.
    print("KERNEL_OK")
</pallas_src>

<mosaic_0001>
module attributes {stable_mosaic.version = 11 : i64} {
  func.func @_ema_lerp_kernel(%arg0: i32, %arg1: memref<1x1xf32, #tpu.memory_space<smem>>, %arg2: memref<8x512xf32, #tpu.memory_space<vmem>>, %arg3: memref<8x512xf32, #tpu.memory_space<vmem>>, %arg4: memref<8x512xf32, #tpu.memory_space<vmem>>) attributes {dimension_semantics = [#tpu.dimension_semantics<parallel>], iteration_bounds = array<i64: 2>, scalar_prefetch = 0 : i64, scratch_operands = 0 : i64, tpu.core_type = #tpu.core_type<tc>, window_params = [{transform_indices = @transform_0, window_bounds = array<i64: 1, 1>}, {transform_indices = @transform_1, window_bounds = array<i64: 8, 512>}, {transform_indices = @transform_2, window_bounds = array<i64: 8, 512>}, {transform_indices = @transform_3, window_bounds = array<i64: 8, 512>}]} {
    %c0 = arith.constant 0 : index
    %c0_0 = arith.constant 0 : index
    %0 = memref.load %arg1[%c0, %c0_0] : memref<1x1xf32, #tpu.memory_space<smem>>
    %c0_1 = arith.constant 0 : index
    %c0_2 = arith.constant 0 : index
    %1 = vector.load %arg2[%c0_1, %c0_2] : memref<8x512xf32, #tpu.memory_space<vmem>>, vector<8x512xf32>
    %c0_3 = arith.constant 0 : index
    %c0_4 = arith.constant 0 : index
    %2 = vector.load %arg3[%c0_3, %c0_4] : memref<8x512xf32, #tpu.memory_space<vmem>>, vector<8x512xf32>
    %3 = arith.subf %2, %1 : vector<8x512xf32>
    %4 = vector.broadcast %0 : f32 to vector<8x512xf32>
    %5 = arith.mulf %3, %4 : vector<8x512xf32>
    %6 = arith.addf %1, %5 : vector<8x512xf32>
    %c0_5 = arith.constant 0 : index
    %c0_6 = arith.constant 0 : index
    %7 = vector.load %arg4[%c0_5, %c0_6] : memref<8x512xf32, #tpu.memory_space<vmem>>, vector<8x512xf32>
    tpu.vector_store %arg4[%c0_5, %c0_6], %6 {strides = array<i32>} : memref<8x512xf32, #tpu.memory_space<vmem>>, vector<8x512xf32>,
    return
  }
  func.func @transform_0(%arg0: i32) -> (i32, i32) {
    %c0_i32 = arith.constant 0 : i32
    %c0_i32_0 = arith.constant 0 : i32
    %c0_i32_1 = arith.constant 0 : i32
    return %c0_i32, %c0_i32_0 : i32, i32
  }
  func.func @transform_1(%arg0: i32) -> (i32, i32) {
    %c0_i32 = arith.constant 0 : i32
    %c0_i32_0 = arith.constant 0 : i32
    return %arg0, %c0_i32 : i32, i32
  }
  func.func @transform_2(%arg0: i32) -> (i32, i32) {
    %c0_i32 = arith.constant 0 : i32
    %c0_i32_0 = arith.constant 0 : i32
    return %arg0, %c0_i32 : i32, i32
  }
  func.func @transform_3(%arg0: i32) -> (i32, i32) {
    %c0_i32 = arith.constant 0 : i32
    %c0_i32_0 = arith.constant 0 : i32
    return %arg0, %c0_i32 : i32, i32
  }
}

</mosaic_0001>

<llo_original>
// kernel: ema_update_step.1
$region0: #{ema_update_step.1}
  #allocation0 [shape = 'u32[]', space=smem, size = 0x4, offset = 0x4, fixed_abs, tag = 'smem constant byte address 0x4 - core index']
  #allocation1 [shape = 'u32[72,128]{1,0:T(1,128)}', space=vmem, size = 0x9000, scoped, tag = 'internal scratch']
  #allocation2 [shape = 'f32[1,1]{1,0:T(1,128)S(6)}', space=smem, size = 0x200, scoped, tag = 'scoped memory for ema_update_step.1']
  %s0 = inlined_call_operand.<no memory space> [shape: f32[1,1], index: 0, kind: input, shape index: {}]
  %s1 = inlined_call_operand.hbm [shape: f32[16,512], index: 1, kind: input, shape index: {}, may-alias: {1,3}]
  %s2 = inlined_call_operand.hbm [shape: f32[16,512], index: 2, kind: input, shape index: {}]
  %s3 = inlined_call_operand.hbm [shape: f32[16,512], index: 3, kind: output, shape index: {}, may-alias: {1,3}]
  %s4 = sld [smem:[#allocation0]]
  $region53: #{ema_update_step.1} parent=0
    _
  %s6 = ssub.s32 1, %s4
  %s7 = scalar_select 0, %s6, %s4
  %8 = sst [smem:[#allocation2]] %s0
  $region1: #{ema_update_step.1} parent=0
    #allocation3 [shape = 'u8[32768]{0}', space=vmem, size = 0x8000, scoped, tag = 'input window, operand 1']
    #allocation4 [shape = 's32[2]{0}', space=sflag, size = 0x8, scoped, tag = 'scoped memory for ema_update_step.1']
    #allocation5 [shape = 's32[2]{0}', space=sflag, size = 0x8, scoped, tag = 'scoped memory for ema_update_step.1']
    #allocation6 [shape = 'u8[32768]{0}', space=vmem, size = 0x8000, scoped, tag = 'input window, operand 2']
    #allocation7 [shape = 's32[2]{0}', space=sflag, size = 0x8, scoped, tag = 'scoped memory for ema_update_step.1']
    #allocation8 [shape = 'u8[32768]{0}', space=vmem, size = 0x8000, scoped, tag = 'output window, operand 0']
    %9 = vsyncpa [#allocation4], 0
    %s10 = scalar_lea.sflag [#allocation4], 1
    %11 = vsyncpa %s10, 0
    %12 = vsyncpa [#allocation7], 0
    %s13 = scalar_lea.sflag [#allocation7], 1
    %14 = vsyncpa %s13, 0
    %15 = vsyncpa [#allocation5], 0
    %s16 = scalar_lea.sflag [#allocation5], 1
    %17 = vsyncpa %s16, 0
    loop: start=0, step=1, limit=4
    $region2: #{ema_update_step.1} parent=1 // loop_pre_header
      _
    $region3: #{ema_update_step.1} parent=1 // loop_header
      %s19 = sphi 0, %s23
      %p20 = scmp.ge.s32.totalorder %s19, 4
      %s27 = sphi 0, %s27
      %s29 = sphi 0, %s27
      %s30 = sphi 0, %s29
      %s44 = sphi 0, %s30
      %s50 = sphi 0, %s52
      %s53 = sphi 0, %s50
      %s54 = sphi 0, %s53
      %s70 = sphi 0, %s54
      %s76 = sphi 0, %s78
      %s79 = sphi 0, %s76
      %s80 = sphi 0, %s79
      %s96 = sphi 0, %s80
      %s102 = sphi 0, %s104
      %s105 = sphi 0, %s102
      %s106 = sphi 0, %s105
      %s122 = sphi 0, %s106
    $region4: #{ema_update_step.1} parent=1 // loop_header_branch
      %22 = sbr.rel (%p20) target = $region8
    $region5: #{ema_update_step.1} parent=1 // loop_body
      %s24 = ssub.s32 %s19, 1
      %s25 = ssub.s32 %s19, 2
      %s26 = sadd.s32 %s19, 1
      %s28 = sadd.s32 %s27, 1
      %p31 = scmp.eq.s32.totalorder %s19, 1
      %p32 = scmp.ne.s32.totalorder %s27, %s29
      %p33 = scmp.eq.s32.totalorder %s19, 0
      %p34 = por %p32, %p33
      %p35 = scmp.ne.s32.totalorder %s27, %s29
      %p36 = scmp.eq.s32.totalorder %s24, 1
      %p37 = por %p35, %p36
      %p38 = scmp.ne.s32.totalorder %s29, %s30
      %p39 = scmp.eq.s32.totalorder %s24, 0
      %p40 = por %p38, %p39
      %p41 = scmp.ne.s32.totalorder %s29, %s30
      %p42 = scmp.eq.s32.totalorder %s25, 1
      %p43 = por %p41, %p42
      %p45 = scmp.ne.s32.totalorder %s30, %s44
      %p46 = scmp.eq.s32.totalorder %s25, 0
      %p47 = por %p45, %p46
      %s48 = ssub.s32 %s19, %s26
      %p49 = scmp.eq.s32.totalorder %s48, 0
      %s51 = sadd.s32 %s50, 1
      %s52 = scalar_select %p49, %s50, %s51
      %p55 = pneg %p49
      %p56 = scmp.eq.s32.totalorder %s19, 1
      %p57 = por %p55, %p56
      %p58 = scmp.ne.s32.totalorder %s50, %s53
      %p59 = scmp.eq.s32.totalorder %s19, 0
      %p60 = por %p58, %p59
      %p61 = scmp.ne.s32.totalorder %s50, %s53
      %p62 = scmp.eq.s32.totalorder %s24, 1
      %p63 = por %p61, %p62
      %p64 = scmp.ne.s32.totalorder %s53, %s54
      %p65 = scmp.eq.s32.totalorder %s24, 0
      %p66 = por %p64, %p65
      %p67 = scmp.ne.s32.totalorder %s53, %s54
      %p68 = scmp.eq.s32.totalorder %s25, 1
      %p69 = por %p67, %p68
      %p71 = scmp.ne.s32.totalorder %s54, %s70
      %p72 = scmp.eq.s32.totalorder %s25, 0
      %p73 = por %p71, %p72
      %s74 = ssub.s32 %s19, %s26
      %p75 = scmp.eq.s32.totalorder %s74, 0
      %s77 = sadd.s32 %s76, 1
      %s78 = scalar_select %p75, %s76, %s77
      %p81 = pneg %p75
      %p82 = scmp.eq.s32.totalorder %s19, 1
      %p83 = por %p81, %p82
      %p84 = scmp.ne.s32.totalorder %s76, %s79
      %p85 = scmp.eq.s32.totalorder %s19, 0
      %p86 = por %p84, %p85
      %p87 = scmp.ne.s32.totalorder %s76, %s79
      %p88 = scmp.eq.s32.totalorder %s24, 1
      %p89 = por %p87, %p88
      %p90 = scmp.ne.s32.totalorder %s79, %s80
      %p91 = scmp.eq.s32.totalorder %s24, 0
      %p92 = por %p90, %p91
      %p93 = scmp.ne.s32.totalorder %s79, %s80
      %p94 = scmp.eq.s32.totalorder %s25, 1
      %p95 = por %p93, %p94
      %p97 = scmp.ne.s32.totalorder %s80, %s96
      %p98 = scmp.eq.s32.totalorder %s25, 0
      %p99 = por %p97, %p98
      %s100 = ssub.s32 %s19, %s26
      %p101 = scmp.eq.s32.totalorder %s100, 0
      %s103 = sadd.s32 %s102, 1
      %s104 = scalar_select %p101, %s102, %s103
      %p107 = pneg %p101
      %p108 = scmp.eq.s32.totalorder %s19, 1
      %p109 = por %p107, %p108
      %p110 = scmp.ne.s32.totalorder %s102, %s105
      %p111 = scmp.eq.s32.totalorder %s19, 0
      %p112 = por %p110, %p111
      %p113 = scmp.ne.s32.totalorder %s102, %s105
      %p114 = scmp.eq.s32.totalorder %s24, 1
      %p115 = por %p113, %p114
      %p116 = scmp.ne.s32.totalorder %s105, %s106
      %p117 = scmp.eq.s32.totalorder %s24, 0
      %p118 = por %p116, %p117
      %p119 = scmp.ne.s32.totalorder %s105, %s106
      %p120 = scmp.eq.s32.totalorder %s25, 1
      %p121 = por %p119, %p120
      %p123 = scmp.ne.s32.totalorder %s106, %s122
      %p124 = scmp.eq.s32.totalorder %s25, 0
      %p125 = por %p123, %p124
      %p126 = scmp.le.s32.totalorder 1, %s19
      %p127 = scmp.lt.s32.totalorder %s19, 3
      %p128 = pnand %p126, %p127
      %p129 = pneg %p128
      // Predicated region
      $region9: #{ema_update_step.1} parent=5 // pred_check
        _
      $region10: #{ema_update_step.1} parent=5 // pred_check_branch
        %131 = sbr.rel (%p128) target = $region12
      $region11: #{ema_update_step.1} parent=5 // pred_region
        %s132 = ssub.s32 %s19, 1
        // Predicated region
        $region13: #{ema_update_step.1} parent=11 // pred_check
          %p133 = pneg %p40
        $region14: #{ema_update_step.1} parent=11 // pred_check_branch
          %135 = sbr.rel (%p133) target = $region16
        $region15: #{ema_update_step.1} parent=11 // pred_region
          _
        $region16: #{ema_update_step.1} parent=11 // pred_fallthru
          _
      $region12: #{ema_update_step.1} parent=5 // pred_fallthru
        _
      %p136 = scmp.lt.s32.totalorder %s19, 2
      // Predicated region
      $region17: #{ema_update_step.1} parent=5 // pred_check
        %p137 = pneg %p136
      $region18: #{ema_update_step.1} parent=5 // pred_check_branch
        %139 = sbr.rel (%p137) target = $region20
      $region19: #{ema_update_step.1} parent=5 // pred_region
        // Predicated region
        $region21: #{ema_update_step.1} parent=19 // pred_check
          %p140 = pneg %p60
        $region22: #{ema_update_step.1} parent=19 // pred_check_branch
          %142 = sbr.rel (%p140) target = $region24
        $region23: #{ema_update_step.1} parent=19 // pred_region
          %s143 = sand.u32 %s50, 1
          %s144 = scalar_lea.sflag [#allocation4], %s143
          %s145 = sand.u32 %s50, 1
          %s146 = smul.addr %s145, 32
          %s147 = scalar_lea.vmem [#allocation3], %s146
          %149 = vsyncadd %s144, 0
          %s150 = smul.addr %s19, 4
          %s151 = smul.addr %s150, 8
          %s152 = scalar_lea.hbm %s1, %s151
          %s154 = sshll.u32 %s152, 4
          %s155 = int_to_ptr.hbm [resolvable:$true] %s154
          %s156 = sshll.u32 %s147, 4
          %s157 = int_to_ptr.vmem [resolvable:$true] %s156
          %159 = dma.hbm_to_vmem [thread:$0]  %s155, 512, %s157, %s144
        $region24: #{ema_update_step.1} parent=19 // pred_fallthru
          _
        // Predicated region
        $region25: #{ema_update_step.1} parent=19 // pred_check
          %p160 = pneg %p86
        $region26: #{ema_update_step.1} parent=19 // pred_check_branch
          %162 = sbr.rel (%p160) target = $region28
        $region27: #{ema_update_step.1} parent=19 // pred_region
          %s163 = sand.u32 %s76, 1
          %s164 = scalar_lea.sflag [#allocation7], %s163
          %s165 = sand.u32 %s76, 1
          %s166 = smul.addr %s165, 32
          %s167 = scalar_lea.vmem [#allocation6], %s166
          %169 = vsyncadd %s164, 0
          %s170 = smul.addr %s19, 4
          %s171 = smul.addr %s170, 8
          %s172 = scalar_lea.hbm %s2, %s171
          %s174 = sshll.u32 %s172, 4
          %s175 = int_to_ptr.hbm [resolvable:$true] %s174
          %s176 = sshll.u32 %s167, 4
          %s177 = int_to_ptr.vmem [resolvable:$true] %s176
          %179 = dma.hbm_to_vmem [thread:$0]  %s175, 512, %s177, %s164
        $region28: #{ema_update_step.1} parent=19 // pred_fallthru
          _
      $region20: #{ema_update_step.1} parent=5 // pred_fallthru
        _
      %p180 = scmp.le.s32.totalorder 1, %s19
      %p181 = scmp.lt.s32.totalorder %s19, 3
      %p182 = pnand %p180, %p181
      %p183 = pneg %p182
      // Predicated region
      $region29: #{ema_update_step.1} parent=5 // pred_check
        _
      $region30: #{ema_update_step.1} parent=5 // pred_check_branch
        %185 = sbr.rel (%p182) target = $region32
      $region31: #{ema_update_step.1} parent=5 // pred_region
        %s186 = ssub.s32 %s19, 1
        %s187 = sand.u32 %s53, 1
        %s188 = scalar_lea.sflag [#allocation4], %s187
        %s189 = sand.u32 %s53, 1
        %s190 = smul.addr %s189, 32
        %s191 = scalar_lea.vmem [#allocation3], %s190
        // Predicated region
        $region33: #{ema_update_step.1} parent=31 // pred_check
          %p192 = pneg %p66
        $region34: #{ema_update_step.1} parent=31 // pred_check_branch
          %194 = sbr.rel (%p192) target = $region36
        $region35: #{ema_update_step.1} parent=31 // pred_region
          %196 = dma.done %s188, 512
        $region36: #{ema_update_step.1} parent=31 // pred_fallthru
          _
        %s197 = sand.u32 %s79, 1
        %s198 = scalar_lea.sflag [#allocation7], %s197
        %s199 = sand.u32 %s79, 1
        %s200 = smul.addr %s199, 32
        %s201 = scalar_lea.vmem [#allocation6], %s200
        // Predicated region
        $region37: #{ema_update_step.1} parent=31 // pred_check
          %p202 = pneg %p92
        $region38: #{ema_update_step.1} parent=31 // pred_check_branch
          %204 = sbr.rel (%p202) target = $region40
        $region39: #{ema_update_step.1} parent=31 // pred_region
          %206 = dma.done %s198, 512
        $region40: #{ema_update_step.1} parent=31 // pred_fallthru
          _
        %p207 = pneg %p40
        %p208 = pneg %p37
        %s209 = sand.u32 %s53, 1
        %s210 = scalar_lea.sflag [#allocation4], %s209
        %s211 = sand.u32 %s53, 1
        %s212 = smul.addr %s211, 32
        %s213 = scalar_lea.vmem [#allocation3], %s212
        %p214 = pneg %p66
        %p215 = pneg %p63
        %s216 = sand.u32 %s79, 1
        %s217 = scalar_lea.sflag [#allocation7], %s216
        %s218 = sand.u32 %s79, 1
        %s219 = smul.addr %s218, 32
        %s220 = scalar_lea.vmem [#allocation6], %s219
        %p221 = pneg %p92
        %p222 = pneg %p89
        %p223 = pneg %p118
        %p224 = pneg %p115
        %s225 = sand.u32 %s105, 1
        %s226 = scalar_lea.sflag [#allocation5], %s225
        %s227 = sand.u32 %s105, 1
        %s228 = smul.addr %s227, 32
        %s229 = scalar_lea.vmem [#allocation8], %s228
        %s230 = sld [smem:[#allocation2]]
        %v231 = vld [vmem:[%s191] sm:$0xff]
        %v232 = vld [vmem:[%s191 + $0x8] sm:$0xff]
        %v233 = vld [vmem:[%s191 + $0x10] sm:$0xff]
        %v234 = vld [vmem:[%s191 + $0x18] sm:$0xff]
        %v235 = vld [vmem:[%s201] sm:$0xff]
        %v236 = vld [vmem:[%s201 + $0x8] sm:$0xff]
        %v237 = vld [vmem:[%s201 + $0x10] sm:$0xff]
        %v238 = vld [vmem:[%s201 + $0x18] sm:$0xff]
        %v239 = vsub.f32 %v235, %v231
        %v240 = vsub.f32 %v236, %v232
        %v241 = vsub.f32 %v237, %v233
        %v242 = vsub.f32 %v238, %v234
        %v243 = vstv %s230
        %v244 = vmul.f32 %v239, %v243
        %v245 = vmul.f32 %v240, %v243
        %v246 = vmul.f32 %v241, %v243
        %v247 = vmul.f32 %v242, %v243
        %v248 = vadd.f32 %v231, %v244
        %v249 = vadd.f32 %v232, %v245
        %v250 = vadd.f32 %v233, %v246
        %v251 = vadd.f32 %v234, %v247
        %252 = vst [vmem:[%s229] sm:$0xff] %v248
        %253 = vst [vmem:[%s229 + $0x8] sm:$0xff] %v249
        %254 = vst [vmem:[%s229 + $0x10] sm:$0xff] %v250
        %255 = vst [vmem:[%s229 + $0x18] sm:$0xff] %v251
        %s256 = sand.u32 %s105, 1
        %s257 = scalar_lea.sflag [#allocation5], %s256
        %s258 = sand.u32 %s105, 1
        %s259 = smul.addr %s258, 32
        %s260 = scalar_lea.vmem [#allocation8], %s259
        // Predicated region
        $region41: #{ema_update_step.1} parent=31 // pred_check
          %p261 = pneg %p115
        $region42: #{ema_update_step.1} parent=31 // pred_check_branch
          %263 = sbr.rel (%p261) target = $region44
        $region43: #{ema_update_step.1} parent=31 // pred_region
          %265 = vsyncadd %s257, 0
          %s266 = smul.addr %s24, 4
          %s267 = smul.addr %s266, 8
          %s268 = scalar_lea.hbm %s3, %s267
          %s270 = sshll.u32 %s260, 4
          %s271 = int_to_ptr.vmem [resolvable:$true] %s270
          %s272 = sshll.u32 %s268, 4
          %s273 = int_to_ptr.hbm [resolvable:$true] %s272
          %275 = dma.vmem_to_hbm [thread:$0]  %s271, 512, %s273, %s257
        $region44: #{ema_update_step.1} parent=31 // pred_fallthru
          _
      $region32: #{ema_update_step.1} parent=5 // pred_fallthru
        _
      %p276 = scmp.le.s32.totalorder 2, %s19
      // Predicated region
      $region45: #{ema_update_step.1} parent=5 // pred_check
        %p277 = pneg %p276
      $region46: #{ema_update_step.1} parent=5 // pred_check_branch
        %279 = sbr.rel (%p277) target = $region48
      $region47: #{ema_update_step.1} parent=5 // pred_region
        %s280 = ssub.s32 %s19, 2
        // Predicated region
        $region49: #{ema_update_step.1} parent=47 // pred_check
          %p281 = pneg %p121
        $region50: #{ema_update_step.1} parent=47 // pred_check_branch
          %283 = sbr.rel (%p281) target = $region52
        $region51: #{ema_update_step.1} parent=47 // pred_region
          %s284 = sand.u32 %s106, 1
          %s285 = scalar_lea.sflag [#allocation5], %s284
          %s286 = sand.u32 %s106, 1
          %s287 = smul.addr %s286, 32
          %s288 = scalar_lea.vmem [#allocation8], %s287
          %290 = dma.done %s285, 512
        $region52: #{ema_update_step.1} parent=47 // pred_fallthru
          _
      $region48: #{ema_update_step.1} parent=5 // pred_fallthru
        _
    $region6: #{ema_update_step.1} parent=1 // loop_footer
      %s23 = sadd.s32 1, %s19
    $region7: #{ema_update_step.1} parent=1 // loop_footer_branch
      %18 = sbr.rel target = $region3
    $region8: #{ema_update_step.1} parent=1 // loop_exit
      _
    %291 = vsyncpa [#allocation4], 1
    %s292 = scalar_lea.sflag [#allocation4], 1
    %293 = vsyncpa %s292, 1
    %294 = vsyncpa [#allocation7], 1
    %s295 = scalar_lea.sflag [#allocation7], 1
    %296 = vsyncpa %s295, 1
    %297 = vsyncpa [#allocation5], 1
    %s298 = scalar_lea.sflag [#allocation5], 1
    %299 = vsyncpa %s298, 1

</llo_original>
